<compile_context>
chip_gen: v5e
topology: v5e:2x2
jax: 0.10.0
libtpu: 0.0.40
codegen_flags: <defaults>
</compile_context>

<pallas_src>
import math
from functools import partial

import jax
import jax.numpy as jnp
from jax.experimental import pallas as pl
from jax.experimental.pallas import tpu as pltpu


# ---------------------------------------------------------------------------
# In-kernel bilinear grid_sample weights (align_corners=False, zeros padding).
# Coordinates are normalized to [0, 1]; out-of-range corners never match an
# in-range pixel index, which reproduces zeros padding for free.
# ---------------------------------------------------------------------------
def _axis_weights(p, n_pix):
    """p: (1, P) coords along one axis -> (n_pix, P) separable axis weights."""
    P = p.shape[1]
    idx = jax.lax.broadcasted_iota(jnp.int32, (n_pix, P), 0)
    ip = p * n_pix - 0.5                      # PyTorch grid_sample unnormalize
    i0f = jnp.floor(ip)
    w1 = ip - i0f
    i0 = i0f.astype(jnp.int32)
    return (jnp.where(idx == i0, 1.0 - w1, 0.0)
            + jnp.where(idx == i0 + 1, w1, 0.0))


def _dense_weights(px, py, H, W):
    """px, py: (1, P) -> (H*W, P) factorized dense weights  w = fx * fy."""
    P = px.shape[1]
    hw = jax.lax.broadcasted_iota(jnp.int32, (H * W, P), 0)
    hx = hw % W
    hy = hw // W
    ix = px * W - 0.5
    iy = py * H - 0.5
    x0f = jnp.floor(ix)
    y0f = jnp.floor(iy)
    wx1 = ix - x0f
    wy1 = iy - y0f
    x0 = x0f.astype(jnp.int32)
    y0 = y0f.astype(jnp.int32)
    fx = jnp.where(hx == x0, 1.0 - wx1, 0.0) + jnp.where(hx == x0 + 1, wx1, 0.0)
    fy = jnp.where(hy == y0, 1.0 - wy1, 0.0) + jnp.where(hy == y0 + 1, wy1, 0.0)
    return fx * fy


# ---------------------------------------------------------------------------
# Pallas kernel 1: per-batch uncertainty of the over-generated points.
#   diff = top1 - top2 per pixel (computed in-kernel), then a separable
#   bilinear sample of diff at each point; u = -sampled_diff, stored (1, kN).
# ---------------------------------------------------------------------------
def _uncertainty_kernel(pts_ref, out_ref, u_ref, *, C, H, W):
    o = out_ref[0].astype(jnp.float32)                       # (C, H, W)
    chans = [o[c] for c in range(C)]                         # leading-dim picks

    top1 = chans[0]
    for c in range(1, C):
        top1 = jnp.maximum(top1, chans[c])
    # Second max, removing exactly one instance of the max (ties -> diff == 0,
    # matching torch.sort semantics).
    top2 = jnp.full((H, W), -jnp.inf, jnp.float32)
    used = jnp.zeros((H, W), jnp.bool_)
    for c in range(C):
        first = (chans[c] == top1) & (~used)
        top2 = jnp.where(first, top2, jnp.maximum(top2, chans[c]))
        used = used | first
    diff = top1 - top2                                        # (H, W)

    pts = pts_ref[0].astype(jnp.float32)                      # (2, kN)
    wx = _axis_weights(pts[0:1, :], W)                        # (W, kN)
    wy = _axis_weights(pts[1:2, :], H)                        # (H, kN)
    t = jnp.dot(diff, wx, preferred_element_type=jnp.float32)  # (H, kN)  MXU
    u_ref[0] = -jnp.sum(t * wy, axis=0, keepdims=True)        # (1, kN) lane-dense


def _pallas_uncertainty(out, over_pts):
    """out: (B, C, H, W); over_pts: (B, kN, 2) in [0,1] -> uncertainty (B, kN)."""
    B, C, H, W = out.shape
    kN = over_pts.shape[1]
    pts_t = jnp.swapaxes(over_pts, 1, 2)                      # (B, 2, kN)

    kern = partial(_uncertainty_kernel, C=C, H=H, W=W)
    u = pl.pallas_call(
        kern,
        out_shape=jax.ShapeDtypeStruct((B, 1, kN), jnp.float32),
        grid_spec=pltpu.PrefetchScalarGridSpec(
            num_scalar_prefetch=0,
            grid=(B,),
            in_specs=[pl.BlockSpec((1, 2, kN), lambda b: (b, 0, 0)),
                      pl.BlockSpec((1, C, H, W), lambda b: (b, 0, 0, 0))],
            out_specs=pl.BlockSpec((1, 1, kN), lambda b: (b, 0, 0))),
        compiler_params=pltpu.CompilerParams(
            dimension_semantics=("parallel",)),
    )(pts_t, out)
    return u[:, 0, :]                                         # (B, kN)


# ---------------------------------------------------------------------------
# Pallas kernel 2: fused channel-projection + point_sample + bias epilogue.
#   rend = sample(Wc @ out, pts) + sample(Wf @ res2, pts) + b
# (identical to mlp(cat(sample(out), sample(res2))) since both ops are linear)
# ---------------------------------------------------------------------------
def _rend_kernel(pts_ref, out_ref, res2_ref, wc_ref, wf_ref, b_ref, rend_ref,
                 *, Hm, Wm, Hr, Wr):
    pts = pts_ref[0].astype(jnp.float32)                      # (2, Npt)
    px = pts[0:1, :]
    py = pts[1:2, :]

    # Channel projection first: wide lane-dense N (= HW) on the MXU, and the
    # big res2 operand is reduced to num_classes channels before sampling.
    proj_c = jnp.dot(wc_ref[...], out_ref[0],
                     preferred_element_type=jnp.float32)      # (nc, HWm)
    proj_f = jnp.dot(wf_ref[...], res2_ref[0],
                     preferred_element_type=jnp.float32)      # (nc, HWr)

    # TODO(synk): at production res2 sizes switch this to the fully separable
    # Wx/Wy form (O(Npt*(H+W)) weight build + per-class weighted reduces) and
    # tile HWr / Npt with extra grid axes sized from pltpu.get_tpu_info();
    # the factorized dense form is kept here because it lowers with plain 2-D
    # elementwise ops + jnp.dot only.
    w_m = _dense_weights(px, py, Hm, Wm)                      # (HWm, Npt)
    w_r = _dense_weights(px, py, Hr, Wr)                      # (HWr, Npt)

    rend = (jnp.dot(proj_c, w_m, preferred_element_type=jnp.float32)
            + jnp.dot(proj_f, w_r, preferred_element_type=jnp.float32)
            + b_ref[...])                                     # (nc, Npt)
    rend_ref[0] = rend.astype(rend_ref.dtype)


def _pallas_rend(out, res2, points, mlp_w, mlp_b):
    """out:(B,C,Hm,Wm) res2:(B,Cr,Hr,Wr) points:(B,Npt,2) -> rend (B,nc,Npt)."""
    B, C, Hm, Wm = out.shape
    _, Cr, Hr, Wr = res2.shape
    nc = mlp_w.shape[0]
    Npt = points.shape[1]
    HWm, HWr = Hm * Wm, Hr * Wr

    out_flat = out.reshape(B, C, HWm)                         # no dtype change
    res2_flat = res2.reshape(B, Cr, HWr)
    pts_t = jnp.swapaxes(points, 1, 2)                        # (B, 2, Npt)
    wc = mlp_w[:, :C]                                         # coarse columns
    wf = mlp_w[:, C:]                                         # fine columns
    b_col = mlp_b.reshape(nc, 1)

    kern = partial(_rend_kernel, Hm=Hm, Wm=Wm, Hr=Hr, Wr=Wr)
    rend = pl.pallas_call(
        kern,
        out_shape=jax.ShapeDtypeStruct((B, nc, Npt), jnp.float32),
        grid_spec=pltpu.PrefetchScalarGridSpec(
            num_scalar_prefetch=0,
            grid=(B,),
            in_specs=[pl.BlockSpec((1, 2, Npt), lambda b: (b, 0, 0)),
                      pl.BlockSpec((1, C, HWm), lambda b: (b, 0, 0)),
                      pl.BlockSpec((1, Cr, HWr), lambda b: (b, 0, 0)),
                      pl.BlockSpec((nc, C), lambda b: (0, 0)),
                      pl.BlockSpec((nc, Cr), lambda b: (0, 0)),
                      pl.BlockSpec((nc, 1), lambda b: (0, 0))],
            out_specs=pl.BlockSpec((1, nc, Npt), lambda b: (b, 0, 0))),
        compiler_params=pltpu.CompilerParams(
            dimension_semantics=("parallel",)),
    )(pts_t, out_flat, res2_flat, wc, wf, b_col)
    return rend


# ---------------------------------------------------------------------------
# PointHead forward (training branch — the module default).
# ---------------------------------------------------------------------------
def sampling_points_train(out, N, key, k=3, beta=0.75):
    B = out.shape[0]
    k1, k2 = jax.random.split(key)
    over = jax.random.uniform(k1, (B, k * N, 2), jnp.float32)
    uncertainty = _pallas_uncertainty(out, over)              # Pallas kernel 1
    n_imp = int(beta * N)
    # TODO(synk): top_k + the importance gather are data-dependent indexing
    # with no clean Pallas TPU mapping; kept in plain JAX.
    _, idx = jax.lax.top_k(uncertainty, n_imp)
    importance = jnp.take_along_axis(over, idx[..., None], axis=1)
    coverage = jax.random.uniform(k2, (B, N - n_imp, 2), jnp.float32)
    return jnp.concatenate([importance, coverage], axis=1)    # (B, N, 2)


def point_head_forward(params, x, res2, out, key, k=3, beta=0.75):
    """Training-mode PointHead.forward(x, res2, out)."""
    # TODO(synk): eval-mode inference() subdivision loop (interpolate+scatter)
    # is not implemented; training branch only (module default).
    N = x.shape[-1] // 16
    points = sampling_points_train(out, N, key, k=k, beta=beta)
    rend = _pallas_rend(out, res2, points, params['mlp_w'], params['mlp_b'])
    return {'rend': rend, 'points': points}


def init_point_head(key, num_classes, in_c):
    fan_in = in_c + num_classes
    bound = 1.0 / math.sqrt(fan_in)
    kw, kb = jax.random.split(key)
    w = jax.random.uniform(kw, (num_classes, fan_in), jnp.float32, -bound, bound)
    b = jax.random.uniform(kb, (num_classes,), jnp.float32, -bound, bound)
    return {'mlp_w': w, 'mlp_b': b}


# ---------------------------------------------------------------------------
# Pure-JAX reference (gather-based grid_sample) for correctness checking.
# ---------------------------------------------------------------------------
def _reference_point_sample(inp, coords):
    B, C, H, W = inp.shape
    ix = coords[..., 0] * W - 0.5
    iy = coords[..., 1] * H - 0.5
    x0 = jnp.floor(ix)
    y0 = jnp.floor(iy)
    x1, y1 = x0 + 1.0, y0 + 1.0
    wx1, wy1 = ix - x0, iy - y0
    wx0, wy0 = 1.0 - wx1, 1.0 - wy1

    def gather(xi, yi):
        valid = ((xi >= 0) & (xi < W) & (yi >= 0) & (yi < H)).astype(inp.dtype)
        xc = jnp.clip(xi, 0, W - 1).astype(jnp.int32)
        yc = jnp.clip(yi, 0, H - 1).astype(jnp.int32)
        v = jax.vmap(lambda img, yy, xx: img[:, yy, xx])(inp, yc, xc)
        return v * valid[:, None, :]

    return (gather(x0, y0) * (wx0 * wy0)[:, None, :]
            + gather(x1, y0) * (wx1 * wy0)[:, None, :]
            + gather(x0, y1) * (wx0 * wy1)[:, None, :]
            + gather(x1, y1) * (wx1 * wy1)[:, None, :])


def _reference_rend(out, res2, points, params):
    coarse = _reference_point_sample(out.astype(jnp.float32), points)
    fine = _reference_point_sample(res2.astype(jnp.float32), points)
    feat = jnp.concatenate([coarse, fine], axis=1)            # (B, C+Cr, N)
    return (jnp.einsum('oc,bcn->bon', params['mlp_w'], feat)
            + params['mlp_b'][None, :, None])


if __name__ == "__main__":
    root = jax.random.PRNGKey(0)
    kx, kr, ko, kp, ks = jax.random.split(root, 5)

    B, num_classes, in_c = 2, 4, 32
    x = jax.random.normal(kx, (B, 3, 128, 128), jnp.float32)      # only width used
    res2 = jax.random.normal(kr, (B, in_c, 32, 32), jnp.float32)  # fine features
    out = jax.random.normal(ko, (B, num_classes, 16, 16), jnp.float32)  # coarse pred

    params = init_point_head(kp, num_classes, in_c)
    result = point_head_forward(params, x, res2, out, ks, k=3, beta=0.75)
    jax.block_until_ready(result)

    N = x.shape[-1] // 16
    assert result['rend'].shape == (B, num_classes, N)
    assert result['points'].shape == (B, N, 2)
    assert bool(jnp.all(jnp.isfinite(result['rend'])))
    assert bool(jnp.all(jnp.isfinite(result['points'])))

    # Correctness: fused Pallas project+sample+bias vs plain-JAX sample+MLP
    # reference on the SAME points (no dependence on top_k tie-breaking).
    rend_ref = _reference_rend(out, res2, result['points'], params)
    jax.block_until_ready(rend_ref)
    assert bool(jnp.allclose(result['rend'], rend_ref, atol=1e-4, rtol=1e-3))

    # Uncertainty kernel spot-check: -(interp(top1) - interp(top2)) on fresh points.
    kchk = jax.random.PRNGKey(7)
    pts_chk = jax.random.uniform(kchk, (B, 16, 2), jnp.float32)
    sorted_out = -jnp.sort(-out, axis=1)                      # descending over C
    samp = _reference_point_sample(sorted_out, pts_chk)       # (B, C, 16)
    u_ref = -(samp[:, 0] - samp[:, 1])
    u_ker = _pallas_uncertainty(out, pts_chk)
    assert bool(jnp.allclose(u_ker, u_ref, atol=1e-4, rtol=1e-3))

    print("KERNEL_OK")
</pallas_src>

<mosaic_0001>
module attributes {stable_mosaic.version = 11 : i64} {
  func.func @_uncertainty_kernel(%arg0: i32, %arg1: memref<1x2x24xf32, #tpu.memory_space<vmem>>, %arg2: memref<1x4x16x16xf32, #tpu.memory_space<vmem>>, %arg3: memref<1x1x24xf32, #tpu.memory_space<vmem>>) attributes {dimension_semantics = [#tpu.dimension_semantics<parallel>], iteration_bounds = array<i64: 2>, scalar_prefetch = 0 : i64, scratch_operands = 0 : i64, tpu.core_type = #tpu.core_type<tc>, window_params = [{transform_indices = @transform_0, window_bounds = array<i64: 1, 2, 24>}, {transform_indices = @transform_1, window_bounds = array<i64: 1, 4, 16, 16>}, {transform_indices = @transform_2, window_bounds = array<i64: 1, 1, 24>}]} {
    %c0 = arith.constant 0 : index
    %c0_0 = arith.constant 0 : index
    %c0_1 = arith.constant 0 : index
    %c0_2 = arith.constant 0 : index
    %0 = vector.load %arg2[%c0, %c0_0, %c0_1, %c0_2] : memref<1x4x16x16xf32, #tpu.memory_space<vmem>>, vector<1x4x16x16xf32>
    %1 = vector.shape_cast %0 : vector<1x4x16x16xf32> to vector<4x16x16xf32>
    %2 = vector.extract_strided_slice %1 {offsets = [0, 0, 0], sizes = [1, 16, 16], strides = [1, 1, 1]} : vector<4x16x16xf32> to vector<1x16x16xf32>
    %3 = vector.shape_cast %2 : vector<1x16x16xf32> to vector<16x16xf32>
    %4 = vector.extract_strided_slice %1 {offsets = [1, 0, 0], sizes = [1, 16, 16], strides = [1, 1, 1]} : vector<4x16x16xf32> to vector<1x16x16xf32>
    %5 = vector.shape_cast %4 : vector<1x16x16xf32> to vector<16x16xf32>
    %6 = vector.extract_strided_slice %1 {offsets = [2, 0, 0], sizes = [1, 16, 16], strides = [1, 1, 1]} : vector<4x16x16xf32> to vector<1x16x16xf32>
    %7 = vector.shape_cast %6 : vector<1x16x16xf32> to vector<16x16xf32>
    %8 = vector.extract_strided_slice %1 {offsets = [3, 0, 0], sizes = [1, 16, 16], strides = [1, 1, 1]} : vector<4x16x16xf32> to vector<1x16x16xf32>
    %9 = vector.shape_cast %8 : vector<1x16x16xf32> to vector<16x16xf32>
    %10 = arith.maximumf %3, %5 : vector<16x16xf32>
    %11 = arith.maximumf %10, %7 : vector<16x16xf32>
    %12 = arith.maximumf %11, %9 : vector<16x16xf32>
    %cst = arith.constant 0xFF800000 : f32
    %13 = vector.broadcast %cst : f32 to vector<16x16xf32>
    %false = arith.constant false
    %14 = vector.broadcast %false : i1 to vector<16x16xi1>
    %15 = arith.cmpf oeq, %3, %12 : vector<16x16xf32>
    %cst_3 = arith.constant dense<true> : vector<16x16xi1>
    %16 = arith.xori %14, %cst_3 : vector<16x16xi1>
    %17 = arith.andi %15, %16 : vector<16x16xi1>
    %18 = arith.maximumf %13, %3 : vector<16x16xf32>
    %19 = arith.select %17, %13, %18 : vector<16x16xi1>, vector<16x16xf32>
    %20 = arith.ori %14, %17 : vector<16x16xi1>
    %21 = arith.cmpf oeq, %5, %12 : vector<16x16xf32>
    %cst_4 = arith.constant dense<true> : vector<16x16xi1>
    %22 = arith.xori %20, %cst_4 : vector<16x16xi1>
    %23 = arith.andi %21, %22 : vector<16x16xi1>
    %24 = arith.maximumf %19, %5 : vector<16x16xf32>
    %25 = arith.select %23, %19, %24 : vector<16x16xi1>, vector<16x16xf32>
    %26 = arith.ori %20, %23 : vector<16x16xi1>
    %27 = arith.cmpf oeq, %7, %12 : vector<16x16xf32>
    %cst_5 = arith.constant dense<true> : vector<16x16xi1>
    %28 = arith.xori %26, %cst_5 : vector<16x16xi1>
    %29 = arith.andi %27, %28 : vector<16x16xi1>
    %30 = arith.maximumf %25, %7 : vector<16x16xf32>
    %31 = arith.select %29, %25, %30 : vector<16x16xi1>, vector<16x16xf32>
    %32 = arith.ori %26, %29 : vector<16x16xi1>
    %33 = arith.cmpf oeq, %9, %12 : vector<16x16xf32>
    %cst_6 = arith.constant dense<true> : vector<16x16xi1>
    %34 = arith.xori %32, %cst_6 : vector<16x16xi1>
    %35 = arith.andi %33, %34 : vector<16x16xi1>
    %36 = arith.maximumf %31, %9 : vector<16x16xf32>
    %37 = arith.select %35, %31, %36 : vector<16x16xi1>, vector<16x16xf32>
    %38 = arith.subf %12, %37 : vector<16x16xf32>
    %c0_7 = arith.constant 0 : index
    %c0_8 = arith.constant 0 : index
    %c0_9 = arith.constant 0 : index
    %39 = vector.load %arg1[%c0_7, %c0_8, %c0_9] : memref<1x2x24xf32, #tpu.memory_space<vmem>>, vector<1x2x24xf32>
    %40 = vector.shape_cast %39 : vector<1x2x24xf32> to vector<2x24xf32>
    %41 = vector.extract_strided_slice %40 {offsets = [0, 0], sizes = [1, 24], strides = [1, 1]} : vector<2x24xf32> to vector<1x24xf32>
    %42 = tpu.iota {dimensions = array<i32: 0>} : vector<16x24xi32>
    %cst_10 = arith.constant 1.600000e+01 : f32
    %43 = vector.broadcast %cst_10 : f32 to vector<1x24xf32>
    %44 = arith.mulf %41, %43 : vector<1x24xf32>
    %cst_11 = arith.constant 5.000000e-01 : f32
    %45 = vector.broadcast %cst_11 : f32 to vector<1x24xf32>
    %46 = arith.subf %44, %45 : vector<1x24xf32>
    %47 = math.floor %46 : vector<1x24xf32>
    %48 = arith.subf %46, %47 : vector<1x24xf32>
    %49 = arith.fptosi %47 : vector<1x24xf32> to vector<1x24xi32>
    %50 = vector.broadcast %49 : vector<1x24xi32> to vector<16x24xi32>
    %51 = arith.cmpi eq, %42, %50 : vector<16x24xi32>
    %cst_12 = arith.constant 1.000000e+00 : f32
    %52 = vector.broadcast %cst_12 : f32 to vector<1x24xf32>
    %53 = arith.subf %52, %48 : vector<1x24xf32>
    %cst_13 = arith.constant 0.000000e+00 : f32
    %54 = vector.shape_cast %53 : vector<1x24xf32> to vector<1x24xf32>
    %55 = vector.broadcast %54 : vector<1x24xf32> to vector<16x24xf32>
    %56 = vector.broadcast %cst_13 : f32 to vector<16x24xf32>
    %57 = arith.select %51, %55, %56 : vector<16x24xi1>, vector<16x24xf32>
    %c1_i32 = arith.constant 1 : i32
    %58 = vector.broadcast %c1_i32 : i32 to vector<1x24xi32>
    %59 = arith.addi %49, %58 : vector<1x24xi32>
    %60 = vector.broadcast %59 : vector<1x24xi32> to vector<16x24xi32>
    %61 = arith.cmpi eq, %42, %60 : vector<16x24xi32>
    %cst_14 = arith.constant 0.000000e+00 : f32
    %62 = vector.shape_cast %48 : vector<1x24xf32> to vector<1x24xf32>
    %63 = vector.broadcast %62 : vector<1x24xf32> to vector<16x24xf32>
    %64 = vector.broadcast %cst_14 : f32 to vector<16x24xf32>
    %65 = arith.select %61, %63, %64 : vector<16x24xi1>, vector<16x24xf32>
    %66 = arith.addf %57, %65 : vector<16x24xf32>
    %67 = vector.extract_strided_slice %40 {offsets = [1, 0], sizes = [1, 24], strides = [1, 1]} : vector<2x24xf32> to vector<1x24xf32>
    %68 = tpu.iota {dimensions = array<i32: 0>} : vector<16x24xi32>
    %cst_15 = arith.constant 1.600000e+01 : f32
    %69 = vector.broadcast %cst_15 : f32 to vector<1x24xf32>
    %70 = arith.mulf %67, %69 : vector<1x24xf32>
    %cst_16 = arith.constant 5.000000e-01 : f32
    %71 = vector.broadcast %cst_16 : f32 to vector<1x24xf32>
    %72 = arith.subf %70, %71 : vector<1x24xf32>
    %73 = math.floor %72 : vector<1x24xf32>
    %74 = arith.subf %72, %73 : vector<1x24xf32>
    %75 = arith.fptosi %73 : vector<1x24xf32> to vector<1x24xi32>
    %76 = vector.broadcast %75 : vector<1x24xi32> to vector<16x24xi32>
    %77 = arith.cmpi eq, %68, %76 : vector<16x24xi32>
    %cst_17 = arith.constant 1.000000e+00 : f32
    %78 = vector.broadcast %cst_17 : f32 to vector<1x24xf32>
    %79 = arith.subf %78, %74 : vector<1x24xf32>
    %cst_18 = arith.constant 0.000000e+00 : f32
    %80 = vector.shape_cast %79 : vector<1x24xf32> to vector<1x24xf32>
    %81 = vector.broadcast %80 : vector<1x24xf32> to vector<16x24xf32>
    %82 = vector.broadcast %cst_18 : f32 to vector<16x24xf32>
    %83 = arith.select %77, %81, %82 : vector<16x24xi1>, vector<16x24xf32>
    %c1_i32_19 = arith.constant 1 : i32
    %84 = vector.broadcast %c1_i32_19 : i32 to vector<1x24xi32>
    %85 = arith.addi %75, %84 : vector<1x24xi32>
    %86 = vector.broadcast %85 : vector<1x24xi32> to vector<16x24xi32>
    %87 = arith.cmpi eq, %68, %86 : vector<16x24xi32>
    %cst_20 = arith.constant 0.000000e+00 : f32
    %88 = vector.shape_cast %74 : vector<1x24xf32> to vector<1x24xf32>
    %89 = vector.broadcast %88 : vector<1x24xf32> to vector<16x24xf32>
    %90 = vector.broadcast %cst_20 : f32 to vector<16x24xf32>
    %91 = arith.select %87, %89, %90 : vector<16x24xi1>, vector<16x24xf32>
    %92 = arith.addf %83, %91 : vector<16x24xf32>
    %cst_21 = arith.constant dense<0.000000e+00> : vector<16x24xf32>
    %93 = tpu.matmul %38, %66, %cst_21 {dimension_numbers = #tpu.dot_dimension_numbers<[1], [0], [0], [1], [0, 0, 1, 1], [], []>} : vector<16x16xf32>, vector<16x24xf32>, vector<16x24xf32> -> vector<16x24xf32>
    %94 = arith.mulf %93, %92 : vector<16x24xf32>
    %cst_22 = arith.constant dense<0.000000e+00> : vector<24xf32>
    %95 = vector.multi_reduction <add>, %94, %cst_22 [0] : vector<16x24xf32> to vector<24xf32>
    %96 = vector.shape_cast %95 : vector<24xf32> to vector<1x24xf32>
    %cst_23 = arith.constant 0.000000e+00 : f32
    %97 = vector.broadcast %cst_23 : f32 to vector<1x24xf32>
    %98 = arith.subf %97, %96 : vector<1x24xf32>
    %c0_24 = arith.constant 0 : index
    %c0_25 = arith.constant 0 : index
    %c0_26 = arith.constant 0 : index
    %99 = vector.load %arg3[%c0_24, %c0_25, %c0_26] : memref<1x1x24xf32, #tpu.memory_space<vmem>>, vector<1x1x24xf32>
    %100 = vector.shape_cast %99 : vector<1x1x24xf32> to vector<1x24xf32>
    %101 = vector.shape_cast %98 : vector<1x24xf32> to vector<1x1x24xf32>
    tpu.vector_store %arg3[%c0_24, %c0_25, %c0_26], %101 {strides = array<i32>} : memref<1x1x24xf32, #tpu.memory_space<vmem>>, vector<1x1x24xf32>,
    return
  }
  func.func @transform_0(%arg0: i32) -> (i32, i32, i32) {
    %c0_i32 = arith.constant 0 : i32
    %c0_i32_0 = arith.constant 0 : i32
    %c0_i32_1 = arith.constant 0 : i32
    return %arg0, %c0_i32, %c0_i32_0 : i32, i32, i32
  }
  func.func @transform_1(%arg0: i32) -> (i32, i32, i32, i32) {
    %c0_i32 = arith.constant 0 : i32
    %c0_i32_0 = arith.constant 0 : i32
    %c0_i32_1 = arith.constant 0 : i32
    %c0_i32_2 = arith.constant 0 : i32
    return %arg0, %c0_i32, %c0_i32_0, %c0_i32_1 : i32, i32, i32, i32
  }
  func.func @transform_2(%arg0: i32) -> (i32, i32, i32) {
    %c0_i32 = arith.constant 0 : i32
    %c0_i32_0 = arith.constant 0 : i32
    %c0_i32_1 = arith.constant 0 : i32
    return %arg0, %c0_i32, %c0_i32_0 : i32, i32, i32
  }
}

</mosaic_0001>

<llo_original>
// kernel: tpu_custom_call.1
$region0: #{tpu_custom_call.1}
  #allocation0 [shape = 'u32[]', space=smem, size = 0x4, offset = 0x4, fixed_abs, tag = 'smem constant byte address 0x4 - core index']
  #allocation1 [shape = 'u32[72,128]{1,0:T(1,128)}', space=vmem, size = 0x9000, scoped, tag = 'internal scratch']
  %s0 = inlined_call_operand.hbm [shape: f32[2,2,24], index: 0, kind: input, shape index: {}]
  %s1 = inlined_call_operand.hbm [shape: f32[2,4,16,16], index: 1, kind: input, shape index: {}]
  %s2 = inlined_call_operand.hbm [shape: f32[2,1,24], index: 2, kind: output, shape index: {}]
  %s3 = sld [smem:[#allocation0]]
  $region49: #{tpu_custom_call.1} parent=0
    _
  %s5 = ssub.s32 1, %s3
  %s6 = scalar_select 0, %s5, %s3
  $region1: #{tpu_custom_call.1} parent=0
    #allocation2 [shape = 'u8[2048]{0}', space=vmem, size = 0x800, scoped, tag = 'input window, operand 0']
    #allocation3 [shape = 's32[2]{0}', space=sflag, size = 0x8, scoped, tag = 'scoped memory for tpu_custom_call.1']
    #allocation4 [shape = 's32[2]{0}', space=sflag, size = 0x8, scoped, tag = 'scoped memory for tpu_custom_call.1']
    #allocation5 [shape = 'u8[65536]{0}', space=vmem, size = 0x10000, scoped, tag = 'input window, operand 1']
    #allocation6 [shape = 's32[2]{0}', space=sflag, size = 0x8, scoped, tag = 'scoped memory for tpu_custom_call.1']
    #allocation7 [shape = 'u8[1024]{0}', space=vmem, size = 0x400, scoped, tag = 'output window, operand 0']
    %7 = vsyncpa [#allocation3], 0
    %s8 = scalar_lea.sflag [#allocation3], 1
    %9 = vsyncpa %s8, 0
    %10 = vsyncpa [#allocation6], 0
    %s11 = scalar_lea.sflag [#allocation6], 1
    %12 = vsyncpa %s11, 0
    %13 = vsyncpa [#allocation4], 0
    %s14 = scalar_lea.sflag [#allocation4], 1
    %15 = vsyncpa %s14, 0
    loop: start=0, step=1, limit=4
    $region2: #{tpu_custom_call.1} parent=1 // loop_pre_header
      _
    $region3: #{tpu_custom_call.1} parent=1 // loop_header
      %s17 = sphi 0, %s21
      %p18 = scmp.ge.s32.totalorder %s17, 4
      %s27 = sphi 0, %s29
      %s30 = sphi 0, %s27
      %s31 = sphi 0, %s30
      %s47 = sphi 0, %s31
      %s53 = sphi 0, %s55
      %s56 = sphi 0, %s53
      %s57 = sphi 0, %s56
      %s73 = sphi 0, %s57
      %s79 = sphi 0, %s81
      %s82 = sphi 0, %s79
      %s83 = sphi 0, %s82
      %s99 = sphi 0, %s83
    $region4: #{tpu_custom_call.1} parent=1 // loop_header_branch
      %20 = sbr.rel (%p18) target = $region8
    $region5: #{tpu_custom_call.1} parent=1 // loop_body
      %s22 = ssub.s32 %s17, 1
      %s23 = ssub.s32 %s17, 2
      %s24 = sadd.s32 %s17, 1
      %s25 = ssub.s32 %s17, %s24
      %p26 = scmp.eq.s32.totalorder %s25, 0
      %s28 = sadd.s32 %s27, 1
      %s29 = scalar_select %p26, %s27, %s28
      %p32 = pneg %p26
      %p33 = scmp.eq.s32.totalorder %s17, 1
      %p34 = por %p32, %p33
      %p35 = scmp.ne.s32.totalorder %s27, %s30
      %p36 = scmp.eq.s32.totalorder %s17, 0
      %p37 = por %p35, %p36
      %p38 = scmp.ne.s32.totalorder %s27, %s30
      %p39 = scmp.eq.s32.totalorder %s22, 1
      %p40 = por %p38, %p39
      %p41 = scmp.ne.s32.totalorder %s30, %s31
      %p42 = scmp.eq.s32.totalorder %s22, 0
      %p43 = por %p41, %p42
      %p44 = scmp.ne.s32.totalorder %s30, %s31
      %p45 = scmp.eq.s32.totalorder %s23, 1
      %p46 = por %p44, %p45
      %p48 = scmp.ne.s32.totalorder %s31, %s47
      %p49 = scmp.eq.s32.totalorder %s23, 0
      %p50 = por %p48, %p49
      %s51 = ssub.s32 %s17, %s24
      %p52 = scmp.eq.s32.totalorder %s51, 0
      %s54 = sadd.s32 %s53, 1
      %s55 = scalar_select %p52, %s53, %s54
      %p58 = pneg %p52
      %p59 = scmp.eq.s32.totalorder %s17, 1
      %p60 = por %p58, %p59
      %p61 = scmp.ne.s32.totalorder %s53, %s56
      %p62 = scmp.eq.s32.totalorder %s17, 0
      %p63 = por %p61, %p62
      %p64 = scmp.ne.s32.totalorder %s53, %s56
      %p65 = scmp.eq.s32.totalorder %s22, 1
      %p66 = por %p64, %p65
      %p67 = scmp.ne.s32.totalorder %s56, %s57
      %p68 = scmp.eq.s32.totalorder %s22, 0
      %p69 = por %p67, %p68
      %p70 = scmp.ne.s32.totalorder %s56, %s57
      %p71 = scmp.eq.s32.totalorder %s23, 1
      %p72 = por %p70, %p71
      %p74 = scmp.ne.s32.totalorder %s57, %s73
      %p75 = scmp.eq.s32.totalorder %s23, 0
      %p76 = por %p74, %p75
      %s77 = ssub.s32 %s17, %s24
      %p78 = scmp.eq.s32.totalorder %s77, 0
      %s80 = sadd.s32 %s79, 1
      %s81 = scalar_select %p78, %s79, %s80
      %p84 = pneg %p78
      %p85 = scmp.eq.s32.totalorder %s17, 1
      %p86 = por %p84, %p85
      %p87 = scmp.ne.s32.totalorder %s79, %s82
      %p88 = scmp.eq.s32.totalorder %s17, 0
      %p89 = por %p87, %p88
      %p90 = scmp.ne.s32.totalorder %s79, %s82
      %p91 = scmp.eq.s32.totalorder %s22, 1
      %p92 = por %p90, %p91
      %p93 = scmp.ne.s32.totalorder %s82, %s83
      %p94 = scmp.eq.s32.totalorder %s22, 0
      %p95 = por %p93, %p94
      %p96 = scmp.ne.s32.totalorder %s82, %s83
      %p97 = scmp.eq.s32.totalorder %s23, 1
      %p98 = por %p96, %p97
      %p100 = scmp.ne.s32.totalorder %s83, %s99
      %p101 = scmp.eq.s32.totalorder %s23, 0
      %p102 = por %p100, %p101
      %p103 = scmp.le.s32.totalorder 1, %s17
      %p104 = scmp.lt.s32.totalorder %s17, 3
      %p105 = pnand %p103, %p104
      %p106 = pneg %p105
      // Predicated region
      $region9: #{tpu_custom_call.1} parent=5 // pred_check
        _
      $region10: #{tpu_custom_call.1} parent=5 // pred_check_branch
        %108 = sbr.rel (%p105) target = $region12
      $region11: #{tpu_custom_call.1} parent=5 // pred_region
        %s109 = ssub.s32 %s17, 1
      $region12: #{tpu_custom_call.1} parent=5 // pred_fallthru
        _
      %p110 = scmp.lt.s32.totalorder %s17, 2
      // Predicated region
      $region13: #{tpu_custom_call.1} parent=5 // pred_check
        %p111 = pneg %p110
      $region14: #{tpu_custom_call.1} parent=5 // pred_check_branch
        %113 = sbr.rel (%p111) target = $region16
      $region15: #{tpu_custom_call.1} parent=5 // pred_region
        // Predicated region
        $region17: #{tpu_custom_call.1} parent=15 // pred_check
          %p114 = pneg %p37
        $region18: #{tpu_custom_call.1} parent=15 // pred_check_branch
          %116 = sbr.rel (%p114) target = $region20
        $region19: #{tpu_custom_call.1} parent=15 // pred_region
          %s117 = sand.u32 %s27, 1
          %s118 = scalar_lea.sflag [#allocation3], %s117
          %s119 = sand.u32 %s27, 1
          %s120 = smul.addr %s119, 2
          %s121 = scalar_lea.vmem [#allocation2], %s120
          %123 = vsyncadd %s118, 0
          %s124 = smul.addr %s17, 2
          %s125 = scalar_lea.hbm %s0, %s124
          %s127 = sshll.u32 %s125, 4
          %s128 = int_to_ptr.hbm [resolvable:$true] %s127
          %s129 = sshll.u32 %s121, 4
          %s130 = int_to_ptr.vmem [resolvable:$true] %s129
          %132 = dma.hbm_to_vmem [thread:$0]  %s128, 32, %s130, %s118
        $region20: #{tpu_custom_call.1} parent=15 // pred_fallthru
          _
        // Predicated region
        $region21: #{tpu_custom_call.1} parent=15 // pred_check
          %p133 = pneg %p63
        $region22: #{tpu_custom_call.1} parent=15 // pred_check_branch
          %135 = sbr.rel (%p133) target = $region24
        $region23: #{tpu_custom_call.1} parent=15 // pred_region
          %s136 = sand.u32 %s53, 1
          %s137 = scalar_lea.sflag [#allocation6], %s136
          %s138 = sand.u32 %s53, 1
          %s139 = smul.addr %s138, 64
          %s140 = scalar_lea.vmem [#allocation5], %s139
          %142 = vsyncadd %s137, 0
          %s143 = smul.addr %s17, 8
          %s144 = smul.addr %s143, 8
          %s145 = scalar_lea.hbm %s1, %s144
          %s146 = sshll.u32 %s145, 4
          %s147 = int_to_ptr.hbm [resolvable:$true] %s146
          %s148 = sshll.u32 %s140, 4
          %s149 = int_to_ptr.vmem [resolvable:$true] %s148
          %154 = dma.hbm_to_vmem [thread:$0]  %s147, 1024, %s149, %s137, 128, 128, 8
        $region24: #{tpu_custom_call.1} parent=15 // pred_fallthru
          _
      $region16: #{tpu_custom_call.1} parent=5 // pred_fallthru
        _
      %p155 = scmp.le.s32.totalorder 1, %s17
      %p156 = scmp.lt.s32.totalorder %s17, 3
      %p157 = pnand %p155, %p156
      %p158 = pneg %p157
      // Predicated region
      $region25: #{tpu_custom_call.1} parent=5 // pred_check
        _
      $region26: #{tpu_custom_call.1} parent=5 // pred_check_branch
        %160 = sbr.rel (%p157) target = $region28
      $region27: #{tpu_custom_call.1} parent=5 // pred_region
        %s161 = ssub.s32 %s17, 1
        %s162 = sand.u32 %s30, 1
        %s163 = scalar_lea.sflag [#allocation3], %s162
        %s164 = sand.u32 %s30, 1
        %s165 = smul.addr %s164, 2
        %s166 = scalar_lea.vmem [#allocation2], %s165
        // Predicated region
        $region29: #{tpu_custom_call.1} parent=27 // pred_check
          %p167 = pneg %p43
        $region30: #{tpu_custom_call.1} parent=27 // pred_check_branch
          %169 = sbr.rel (%p167) target = $region32
        $region31: #{tpu_custom_call.1} parent=27 // pred_region
          %171 = dma.done %s163, 32
        $region32: #{tpu_custom_call.1} parent=27 // pred_fallthru
          _
        %s172 = sand.u32 %s56, 1
        %s173 = scalar_lea.sflag [#allocation6], %s172
        %s174 = sand.u32 %s56, 1
        %s175 = smul.addr %s174, 64
        %s176 = scalar_lea.vmem [#allocation5], %s175
        // Predicated region
        $region33: #{tpu_custom_call.1} parent=27 // pred_check
          %p177 = pneg %p69
        $region34: #{tpu_custom_call.1} parent=27 // pred_check_branch
          %179 = sbr.rel (%p177) target = $region36
        $region35: #{tpu_custom_call.1} parent=27 // pred_region
          %181 = dma.done %s173, 1024
        $region36: #{tpu_custom_call.1} parent=27 // pred_fallthru
          _
        %s182 = sand.u32 %s30, 1
        %s183 = scalar_lea.sflag [#allocation3], %s182
        %s184 = sand.u32 %s30, 1
        %s185 = smul.addr %s184, 2
        %s186 = scalar_lea.vmem [#allocation2], %s185
        %p187 = pneg %p43
        %p188 = pneg %p40
        %s189 = sand.u32 %s56, 1
        %s190 = scalar_lea.sflag [#allocation6], %s189
        %s191 = sand.u32 %s56, 1
        %s192 = smul.addr %s191, 64
        %s193 = scalar_lea.vmem [#allocation5], %s192
        %p194 = pneg %p69
        %p195 = pneg %p66
        %p196 = pneg %p95
        %p197 = pneg %p92
        %s198 = sand.u32 %s82, 1
        %s199 = scalar_lea.sflag [#allocation4], %s198
        %s200 = sand.u32 %s82, 1
        %s201 = scalar_lea.vmem [#allocation7], %s200
        %v202 = vld [vmem:[%s176] sm:$0xff]
        %v203 = vld [vmem:[%s176 + $0x8] sm:$0xff]
        %v204 = vld [vmem:[%s176 + $0x10] sm:$0xff]
        %v205 = vld [vmem:[%s176 + $0x18] sm:$0xff]
        %v206 = vld [vmem:[%s176 + $0x20] sm:$0xff]
        %v207 = vld [vmem:[%s176 + $0x28] sm:$0xff]
        %v208 = vld [vmem:[%s176 + $0x30] sm:$0xff]
        %v209 = vld [vmem:[%s176 + $0x38] sm:$0xff]
        %v210 = vmax.f32 %v202, %v204
        %v211 = vmax.f32 %v203, %v205
        %v212 = vmax.f32 %v210, %v206
        %v213 = vmax.f32 %v211, %v207
        %v214 = vmax.f32 %v212, %v208
        %v215 = vmax.f32 %v213, %v209
        %vm216 = vcmp.eq.f32.partialorder %v202, %v214
        %vm217 = vcmp.eq.f32.partialorder %v203, %v215
        %v218 = vsel %vm216, -inf, %v202
        %v219 = vsel %vm217, -inf, %v203
        %vm220 = vcmp.eq.f32.partialorder %v204, %v214
        %vm221 = vcmp.eq.f32.partialorder %v205, %v215
        %vm222 = vmxor %vm216, 1
        %vm223 = vmxor %vm217, 1
        %vm224 = vmand %vm220, %vm222
        %vm225 = vmand %vm221, %vm223
        %v226 = vmax.f32 %v218, %v204
        %v227 = vmax.f32 %v219, %v205
        %v228 = vsel %vm224, %v218, %v226
        %v229 = vsel %vm225, %v219, %v227
        %vm230 = vmor %vm216, %vm224
        %vm231 = vmor %vm217, %vm225
        %vm232 = vcmp.eq.f32.partialorder %v206, %v214
        %vm233 = vcmp.eq.f32.partialorder %v207, %v215
        %vm234 = vmxor %vm230, 1
        %vm235 = vmxor %vm231, 1
        %vm236 = vmand %vm232, %vm234
        %vm237 = vmand %vm233, %vm235
        %v238 = vmax.f32 %v228, %v206
        %v239 = vmax.f32 %v229, %v207
        %v240 = vsel %vm236, %v228, %v238
        %v241 = vsel %vm237, %v229, %v239
        %vm242 = vmor %vm230, %vm236
        %vm243 = vmor %vm231, %vm237
        %vm244 = vcmp.eq.f32.partialorder %v208, %v214
        %vm245 = vcmp.eq.f32.partialorder %v209, %v215
        %vm246 = vmxor %vm242, 1
        %vm247 = vmxor %vm243, 1
        %vm248 = vmand %vm244, %vm246
        %vm249 = vmand %vm245, %vm247
        %v250 = vmax.f32 %v240, %v208
        %v251 = vmax.f32 %v241, %v209
        %v252 = vsel %vm248, %v240, %v250
        %v253 = vsel %vm249, %v241, %v251
        %v254 = vsub.f32 %v214, %v252
        %v255 = vsub.f32 %v215, %v253
        %v256 = vld [vmem:[%s166] sm:$0x3]
        %v257 = vlaneseq
        %v258 = vshrl.u32 %v257, 7
        %v259 = vadd.s32 %v258, 8
        %v260 = vmul.f32 %v256, 16.0
        %v261 = vsub.f32 %v260, 0.5
        %v262 = vfloor.f32 %v261
        %v263 = vsub.f32 %v261, %v262
        %v264 = vcvt.f32.s32.to.zero.pseudo %v262
        %v265 = vperm.slane %v264, 0
        %vm266 = vcmp.eq.s32.totalorder %v258, %v265
        %vm267 = vcmp.eq.s32.totalorder %v259, %v265
        %v268 = vsub.f32 1.0, %v263
        %v269 = vperm.slane %v268, 0
        %v270 = vsel %vm266, %v269, 0.0
        %v271 = vsel %vm267, %v269, 0.0
        %v272 = vadd.s32 %v264, 1
        %v273 = vperm.slane %v272, 0
        %vm274 = vcmp.eq.s32.totalorder %v258, %v273
        %vm275 = vcmp.eq.s32.totalorder %v259, %v273
        %v276 = vperm.slane %v263, 0
        %v277 = vsel %vm274, %v276, 0.0
        %v278 = vsel %vm275, %v276, 0.0
        %v279 = vadd.f32 %v270, %v277
        %v280 = vadd.f32 %v271, %v278
        %v281 = vperm.slane %v264, 1
        %vm282 = vcmp.eq.s32.totalorder %v258, %v281
        %vm283 = vcmp.eq.s32.totalorder %v259, %v281
        %v284 = vperm.slane %v268, 1
        %v285 = vsel %vm282, %v284, 0.0
        %v286 = vsel %vm283, %v284, 0.0
        %v287 = vperm.slane %v272, 1
        %vm288 = vcmp.eq.s32.totalorder %v258, %v287
        %vm289 = vcmp.eq.s32.totalorder %v259, %v287
        %v290 = vperm.slane %v263, 1
        %v291 = vsel %vm288, %v290, 0.0
        %v292 = vsel %vm289, %v290, 0.0
        %v293 = vadd.f32 %v285, %v291
        %v294 = vadd.f32 %v286, %v292
        %vm295 = vcmask 130048
        %v297 = vsel %vm295, %v254, 0
        %v300 = vsel %vm295, %v255, 0
        %302 = vmatpush.msra.mxu0 0.0
        %303 = vmatpush.msra.mxu0 0.0
        %304 = vmatpush.msra.mxu0 0.0
        %305 = vmatpush.msra.mxu0 0.0
        %306 = vmatpush.msra.mxu0 0.0
        %307 = vmatpush.msra.mxu0 0.0
        %308 = vmatpush.msra.mxu0 0.0
        %309 = vmatpush.msra.mxu0 0.0
        %310 = vmatpush.msra.mxu0 0.0
        %311 = vmatpush.msra.mxu0 0.0
        %312 = vmatpush.msra.mxu0 0.0
        %313 = vmatpush.msra.mxu0 0.0
        %314 = vmatpush.msra.mxu0 0.0
        %315 = vmatpush.msra.mxu0 0.0
        %316 = vmatpush.msra.mxu0 %v280
        %317 = vmatpush.msra.mxu0 %v279
        %318 = vmatmul.f32.gmra.mxu0 %v297
        %v319 = vpop.f32.mrf.mxu0
        %v320 = vadd.f32 0.0, %v319
        %321 = vmatmul.f32.gmra.mxu0 %v300
        %v322 = vpop.f32.mrf.mxu0
        %v323 = vadd.f32 0.0, %v322
        %324 = vdwg.mxu0
        %v325 = vmul.f32 %v320, %v293
        %v326 = vmul.f32 %v323, %v294
        %vm327 = vcmask 195584
        %v328 = vsel %vm327, %v325, 0.0
        %v329 = vsel %vm327, %v326, 0.0
        %v330 = vadd.f32 %v328, %v329
        %v331 = vrot.slane %v330, 4
        %v332 = vadd.f32 %v330, %v331
        %v333 = vrot.slane %v332, 2
        %v334 = vadd.f32 %v332, %v333
        %v335 = vrot.slane %v334, 1
        %v336 = vadd.f32 %v334, %v335
        %v337 = vsub.f32 0.0, %v336
        %vm338 = vcmask 188416
        %339 = vst.msk [vmem:[%s201] sm:$0x1] %vm338, %v337
        %s340 = sand.u32 %s82, 1
        %s341 = scalar_lea.sflag [#allocation4], %s340
        %s342 = sand.u32 %s82, 1
        %s343 = scalar_lea.vmem [#allocation7], %s342
        // Predicated region
        $region37: #{tpu_custom_call.1} parent=27 // pred_check
          %p344 = pneg %p92
        $region38: #{tpu_custom_call.1} parent=27 // pred_check_branch
          %346 = sbr.rel (%p344) target = $region40
        $region39: #{tpu_custom_call.1} parent=27 // pred_region
          %348 = vsyncadd %s341, 0
          %s349 = scalar_lea.hbm %s2, %s22
          %s351 = sshll.u32 %s343, 4
          %s352 = int_to_ptr.vmem [resolvable:$true] %s351
          %s353 = sshll.u32 %s349, 4
          %s354 = int_to_ptr.hbm [resolvable:$true] %s353
          %356 = dma.vmem_to_hbm [thread:$0]  %s352, 16, %s354, %s341
        $region40: #{tpu_custom_call.1} parent=27 // pred_fallthru
          _
      $region28: #{tpu_custom_call.1} parent=5 // pred_fallthru
        _
      %p357 = scmp.le.s32.totalorder 2, %s17
      // Predicated region
      $region41: #{tpu_custom_call.1} parent=5 // pred_check
        %p358 = pneg %p357
      $region42: #{tpu_custom_call.1} parent=5 // pred_check_branch
        %360 = sbr.rel (%p358) target = $region44
      $region43: #{tpu_custom_call.1} parent=5 // pred_region
        %s361 = ssub.s32 %s17, 2
        // Predicated region
        $region45: #{tpu_custom_call.1} parent=43 // pred_check
          %p362 = pneg %p98
        $region46: #{tpu_custom_call.1} parent=43 // pred_check_branch
          %364 = sbr.rel (%p362) target = $region48
        $region47: #{tpu_custom_call.1} parent=43 // pred_region
          %s365 = sand.u32 %s83, 1
          %s366 = scalar_lea.sflag [#allocation4], %s365
          %s367 = sand.u32 %s83, 1
          %s368 = scalar_lea.vmem [#allocation7], %s367
          %370 = dma.done %s366, 16
        $region48: #{tpu_custom_call.1} parent=43 // pred_fallthru
          _
      $region44: #{tpu_custom_call.1} parent=5 // pred_fallthru
        _
    $region6: #{tpu_custom_call.1} parent=1 // loop_footer
      %s21 = sadd.s32 1, %s17
    $region7: #{tpu_custom_call.1} parent=1 // loop_footer_branch
      %16 = sbr.rel target = $region3
    $region8: #{tpu_custom_call.1} parent=1 // loop_exit
      _
    %371 = vsyncpa [#allocation3], 1
    %s372 = scalar_lea.sflag [#allocation3], 1
    %373 = vsyncpa %s372, 1
    %374 = vsyncpa [#allocation6], 1
    %s375 = scalar_lea.sflag [#allocation6], 1
    %376 = vsyncpa %s375, 1
    %377 = vsyncpa [#allocation4], 1
    %s378 = scalar_lea.sflag [#allocation4], 1
    %379 = vsyncpa %s378, 1

</llo_original>
